<compile_context>
chip_gen: v6e
topology: v6e:2x2x1
jax: 0.10.0
libtpu: 0.0.40
codegen_flags: <defaults>
</compile_context>

<pallas_src>
import functools

import jax
import jax.numpy as jnp
from jax.experimental import pallas as pl
from jax.experimental.pallas import tpu as pltpu


def _round_up(x, m):
    return ((x + m - 1) // m) * m


def _cdiv(a, b):
    return (a + b - 1) // b


def _vmem_capacity_bytes():
    """Physical VMEM per TensorCore; conservative fallback if query fails."""
    try:
        info = pltpu.get_tpu_info()
        for attr in ("vmem_capacity_bytes", "vmem_bytes", "vmem_size_bytes"):
            v = getattr(info, attr, None)
            if v:
                return int(v)
    except Exception:
        pass
    return 64 * 1024 * 1024  # v7x per-TC VMEM; safe lower bound for v5e/v6e.


def _linear_bias_relu_kernel(x_ref, w_ref, b_ref, o_ref, *, k_rem,
                             compute_dtype):
    """One (i, j) output tile accumulated over the K grid axis.

    x_ref: (tm, tk)  w_ref: (tk, tn)  b_ref: (1, tn)  o_ref: (tm, tn) f32.
    The f32 output block is resident across K and doubles as the accumulator
    (no separate VMEM scratch, no acc->out copy).
    """
    k = pl.program_id(2)
    nk = pl.num_programs(2)

    # Seed the accumulator with the broadcast bias (saves a full-tile VPU add
    # in the epilogue).
    @pl.when(k == 0)
    def _():
        o_ref[...] = jnp.broadcast_to(b_ref[...].astype(jnp.float32),
                                      o_ref.shape)

    x_t = x_ref[...]
    w_t = w_ref[...]
    if k_rem:
        # Ragged K tail: out-of-bounds lanes of the last K block hold garbage
        # (no wrapper-side zero padding), so zero-mask both operands there.
        tk = x_t.shape[1]
        valid = jnp.where(k == nk - 1, k_rem, tk)
        col = jax.lax.broadcasted_iota(jnp.int32, x_t.shape, 1)
        row = jax.lax.broadcasted_iota(jnp.int32, w_t.shape, 0)
        x_t = jnp.where(col < valid, x_t, 0)
        w_t = jnp.where(row < valid, w_t, 0)

    # bf16 operands (default) feed the MXU at full rate on v6e/v7x; the
    # accumulation stays f32 via preferred_element_type.
    o_ref[...] += jnp.dot(
        x_t.astype(compute_dtype),
        w_t.astype(compute_dtype),
        preferred_element_type=jnp.float32,
    )

    # Dropout(p=0.0) / eval-mode dropout is the identity; fused ReLU epilogue.
    @pl.when(k == nk - 1)
    def _():
        o_ref[...] = jnp.maximum(o_ref[...], 0.0)


@functools.partial(
    jax.jit,
    static_argnames=("block_m", "block_n", "block_k", "compute_dtype",
                     "weight_buffers"),
)
def linear_dropout_relu(x, w_t, b, *, block_m=512, block_n=1024, block_k=2048,
                        compute_dtype=jnp.bfloat16, weight_buffers=None):
    """y = relu(dropout_p0(x @ w_t + b)).

    x:   (..., F) activations (f32 or bf16).
    w_t: (F, H)   weight, pre-transposed vs. torch.nn.Linear.weight.
    b:   (H,)     bias.
    Returns (..., H) float32.

    compute_dtype: MXU operand dtype (bf16 default -> full-rate MXU on
      v6e/v7x; pass jnp.float32 for f32-close numerics).
    weight_buffers: optional pipeline depth for the streamed weight tiles
      (e.g. 3 on v5e if the weight DMA is exposed).
    """
    orig_lead = x.shape[:-1]
    F = x.shape[-1]
    Fw, H = w_t.shape
    assert F == Fw, (F, Fw)
    x2 = x.reshape(-1, F)
    M = x2.shape[0]

    # Largest MXU/lane-aligned tiles not exceeding the problem dims.  Ragged
    # edges are handled with pl.cdiv grids (OOB writes dropped) plus in-kernel
    # masking of the K tail -- no jnp.pad copies of x / weight / bias.
    tm = min(block_m, _round_up(M, 8))
    tn = min(block_n, _round_up(H, 128))
    tk = min(block_k, _round_up(F, 128))

    # Megacore (v7x: 2 TensorCores): expose >= 2 independent (i, j) blocks
    # whenever the shapes allow it.
    if _cdiv(M, tm) * _cdiv(H, tn) < 2:
        if H > 128:
            tn = min(tn, _round_up(_cdiv(H, 2), 128))
        elif M > 8:
            tm = min(tm, _round_up(_cdiv(M, 2), 8))

    grid = (_cdiv(M, tm), _cdiv(H, tn), _cdiv(F, tk))
    gm, gn, gk = grid

    x_bytes = jnp.dtype(x2.dtype).itemsize
    w_bytes = jnp.dtype(w_t.dtype).itemsize

    # Double-buffered x / w / bias tiles + resident f32 output tile.
    tile_bytes = (2 * tm * tk * x_bytes + 2 * tk * tn * w_bytes
                  + 2 * tn * 4 + 2 * tm * tn * 4)
    budget = min(int(_vmem_capacity_bytes() * 7 // 8), 100 * 1024 * 1024)
    vmem_limit = int(max(min(tile_bytes + tile_bytes // 4 + (4 << 20), budget),
                         min(32 << 20, budget)))

    # Truthful streamed-bytes estimate: x re-read per N block, w per M block.
    cost = pl.CostEstimate(
        flops=2 * M * F * H,
        transcendentals=0,
        bytes_accessed=int(M * F * x_bytes * gn + F * H * w_bytes * gm
                           + M * H * 4 + H * 4 * gm),
    )

    w_index_map = lambda i, j, k: (k, j)
    if weight_buffers and int(weight_buffers) != 2:
        w_spec = pl.BlockSpec((tk, tn), w_index_map,
                              pipeline_mode=pl.Buffered(int(weight_buffers)))
    else:
        w_spec = pl.BlockSpec((tk, tn), w_index_map)

    kernel = functools.partial(_linear_bias_relu_kernel,
                               k_rem=F % tk, compute_dtype=compute_dtype)

    out = pl.pallas_call(
        kernel,
        out_shape=jax.ShapeDtypeStruct((M, H), jnp.float32),
        grid_spec=pltpu.PrefetchScalarGridSpec(
            num_scalar_prefetch=0,
            grid=grid,
            in_specs=[
                pl.BlockSpec((tm, tk), lambda i, j, k: (i, k)),   # x (rows, K)
                w_spec,                                           # w  (K, N)
                pl.BlockSpec((1, tn), lambda i, j, k: (0, j)),    # bias (N,)
            ],
            out_specs=pl.BlockSpec((tm, tn), lambda i, j, k: (i, j)),
        ),
        compiler_params=pltpu.CompilerParams(
            dimension_semantics=("parallel", "parallel", "arbitrary"),
            vmem_limit_bytes=vmem_limit,
        ),
        cost_estimate=cost,
    )(x2, w_t, b.reshape(1, H))

    return out.reshape(*orig_lead, H)


def reference(x, w_t, b):
    return jnp.maximum(x @ w_t + b, 0.0)


if __name__ == "__main__":
    key = jax.random.PRNGKey(0)

    # Case 1: module-consistent small shapes (drop=0.0 -> identity dropout).
    M1, F1, H1 = 8, 32, 128
    k1, k2, k3, key = jax.random.split(key, 4)
    x1 = jax.random.normal(k1, (M1, F1), dtype=jnp.float32)
    bnd = 1.0 / (F1 ** 0.5)
    w1 = jax.random.uniform(k2, (F1, H1), minval=-bnd, maxval=bnd,
                            dtype=jnp.float32)
    b1 = jax.random.uniform(k3, (H1,), minval=-bnd, maxval=bnd,
                            dtype=jnp.float32)
    ref1 = reference(x1, w1, b1)

    out1 = jax.block_until_ready(linear_dropout_relu(x1, w1, b1))  # bf16 MXU
    assert out1.shape == (M1, H1)
    assert jnp.allclose(out1, ref1, atol=5e-2, rtol=5e-2)

    out1_f32 = jax.block_until_ready(
        linear_dropout_relu(x1, w1, b1, compute_dtype=jnp.float32))
    assert jnp.allclose(out1_f32, ref1, atol=1e-5, rtol=1e-5)

    # Case 2: ragged M/F/H (no padding copies; edge blocks masked/discarded).
    M2, F2, H2 = 19, 50, 200
    k1, k2, k3, key = jax.random.split(key, 4)
    x2 = jax.random.normal(k1, (M2, F2), dtype=jnp.float32)
    bnd2 = 1.0 / (F2 ** 0.5)
    w2 = jax.random.uniform(k2, (F2, H2), minval=-bnd2, maxval=bnd2,
                            dtype=jnp.float32)
    b2 = jax.random.uniform(k3, (H2,), minval=-bnd2, maxval=bnd2,
                            dtype=jnp.float32)
    ref2 = reference(x2, w2, b2)

    out2 = jax.block_until_ready(linear_dropout_relu(x2, w2, b2))
    assert out2.shape == (M2, H2)
    assert jnp.allclose(out2, ref2, atol=5e-2, rtol=5e-2)

    out2_f32 = jax.block_until_ready(
        linear_dropout_relu(x2, w2, b2, compute_dtype=jnp.float32))
    assert jnp.allclose(out2_f32, ref2, atol=1e-5, rtol=1e-5)

    # Case 3: multi-block grid on all three axes, ragged K reduction tail.
    M3, F3, H3 = 40, 300, 384
    k1, k2, k3, key = jax.random.split(key, 4)
    x3 = jax.random.normal(k1, (M3, F3), dtype=jnp.float32)
    bnd3 = 1.0 / (F3 ** 0.5)
    w3 = jax.random.uniform(k2, (F3, H3), minval=-bnd3, maxval=bnd3,
                            dtype=jnp.float32)
    b3 = jax.random.uniform(k3, (H3,), minval=-bnd3, maxval=bnd3,
                            dtype=jnp.float32)
    ref3 = reference(x3, w3, b3)

    out3_f32 = jax.block_until_ready(
        linear_dropout_relu(x3, w3, b3, block_m=16, block_n=128, block_k=128,
                            compute_dtype=jnp.float32))
    assert out3_f32.shape == (M3, H3)
    assert jnp.allclose(out3_f32, ref3, atol=1e-4, rtol=1e-4)

    out3 = jax.block_until_ready(linear_dropout_relu(x3, w3, b3))  # bf16 MXU
    assert jnp.allclose(out3, ref3, atol=5e-2, rtol=5e-2)

    print("KERNEL_OK")
</pallas_src>

<mosaic_0001>
module attributes {stable_mosaic.version = 11 : i64} {
  func.func @_linear_bias_relu_kernel(%arg0: i32, %arg1: i32, %arg2: i32, %arg3: memref<8x128xf32, #tpu.memory_space<vmem>>, %arg4: memref<128x128xf32, #tpu.memory_space<vmem>>, %arg5: memref<1x128xf32, #tpu.memory_space<vmem>>, %arg6: memref<8x128xf32, #tpu.memory_space<vmem>>) attributes {dimension_semantics = [#tpu.dimension_semantics<parallel>, #tpu.dimension_semantics<parallel>, #tpu.dimension_semantics<arbitrary>], iteration_bounds = array<i64: 1, 1, 1>, scalar_prefetch = 0 : i64, scratch_operands = 0 : i64, tpu.core_type = #tpu.core_type<tc>, window_params = [{transform_indices = @transform_0, window_bounds = array<i64: 8, 128>}, {transform_indices = @transform_1, window_bounds = array<i64: 128, 128>}, {transform_indices = @transform_2, window_bounds = array<i64: 1, 128>}, {transform_indices = @transform_3, window_bounds = array<i64: 8, 128>}]} {
    %c0_i32 = arith.constant 0 : i32
    %0 = arith.cmpi eq, %arg2, %c0_i32 : i32
    %1 = arith.extui %0 : i1 to i32
    %c0_i32_0 = arith.constant 0 : i32
    %2 = arith.cmpi ne, %1, %c0_i32_0 : i32
    scf.if %2 {
      %c0_13 = arith.constant 0 : index
      %c0_14 = arith.constant 0 : index
      %28 = vector.load %arg5[%c0_13, %c0_14] : memref<1x128xf32, #tpu.memory_space<vmem>>, vector<1x128xf32>
      %29 = vector.shape_cast %28 : vector<1x128xf32> to vector<1x128xf32>
      %30 = vector.broadcast %29 : vector<1x128xf32> to vector<8x128xf32>
      %c0_15 = arith.constant 0 : index
      %c0_16 = arith.constant 0 : index
      %31 = vector.load %arg6[%c0_15, %c0_16] : memref<8x128xf32, #tpu.memory_space<vmem>>, vector<8x128xf32>
      tpu.vector_store %arg6[%c0_15, %c0_16], %30 {strides = array<i32>} : memref<8x128xf32, #tpu.memory_space<vmem>>, vector<8x128xf32>,
    } else {
    }
    %c0 = arith.constant 0 : index
    %c0_1 = arith.constant 0 : index
    %3 = vector.load %arg3[%c0, %c0_1] : memref<8x128xf32, #tpu.memory_space<vmem>>, vector<8x128xf32>
    %c0_2 = arith.constant 0 : index
    %c0_3 = arith.constant 0 : index
    %4 = vector.load %arg4[%c0_2, %c0_3] : memref<128x128xf32, #tpu.memory_space<vmem>>, vector<128x128xf32>
    %c0_i32_4 = arith.constant 0 : i32
    %5 = arith.cmpi eq, %arg2, %c0_i32_4 : i32
    %c32_i32 = arith.constant 32 : i32
    %c128_i32 = arith.constant 128 : i32
    %6 = arith.select %5, %c32_i32, %c128_i32 : i32
    %7 = tpu.iota {dimensions = array<i32: 1>} : vector<8x128xi32>
    %8 = tpu.iota {dimensions = array<i32: 0>} : vector<128x128xi32>
    %9 = vector.broadcast %6 : i32 to vector<8x128xi32>
    %10 = arith.cmpi slt, %7, %9 : vector<8x128xi32>
    %c0_i32_5 = arith.constant 0 : i32
    %11 = arith.sitofp %c0_i32_5 : i32 to f32
    %12 = vector.broadcast %11 : f32 to vector<8x128xf32>
    %13 = arith.select %10, %3, %12 : vector<8x128xi1>, vector<8x128xf32>
    %14 = vector.broadcast %6 : i32 to vector<128x128xi32>
    %15 = arith.cmpi slt, %8, %14 : vector<128x128xi32>
    %c0_i32_6 = arith.constant 0 : i32
    %16 = arith.sitofp %c0_i32_6 : i32 to f32
    %17 = vector.broadcast %16 : f32 to vector<128x128xf32>
    %18 = arith.select %15, %4, %17 : vector<128x128xi1>, vector<128x128xf32>
    %c0_7 = arith.constant 0 : index
    %c0_8 = arith.constant 0 : index
    %19 = vector.load %arg6[%c0_7, %c0_8] : memref<8x128xf32, #tpu.memory_space<vmem>>, vector<8x128xf32>
    %20 = arith.truncf %13 : vector<8x128xf32> to vector<8x128xbf16>
    %21 = arith.truncf %18 : vector<128x128xf32> to vector<128x128xbf16>
    %cst = arith.constant dense<0.000000e+00> : vector<8x128xf32>
    %22 = tpu.matmul %20, %21, %cst {dimension_numbers = #tpu.dot_dimension_numbers<[1], [0], [0], [1], [0, 0, 1, 1], [], []>} : vector<8x128xbf16>, vector<128x128xbf16>, vector<8x128xf32> -> vector<8x128xf32>
    %23 = arith.addf %19, %22 : vector<8x128xf32>
    %c0_9 = arith.constant 0 : index
    %c0_10 = arith.constant 0 : index
    %24 = vector.load %arg6[%c0_9, %c0_10] : memref<8x128xf32, #tpu.memory_space<vmem>>, vector<8x128xf32>
    tpu.vector_store %arg6[%c0_9, %c0_10], %23 {strides = array<i32>} : memref<8x128xf32, #tpu.memory_space<vmem>>, vector<8x128xf32>,
    %c0_i32_11 = arith.constant 0 : i32
    %25 = arith.cmpi eq, %arg2, %c0_i32_11 : i32
    %26 = arith.extui %25 : i1 to i32
    %c0_i32_12 = arith.constant 0 : i32
    %27 = arith.cmpi ne, %26, %c0_i32_12 : i32
    scf.if %27 {
      %c0_13 = arith.constant 0 : index
      %c0_14 = arith.constant 0 : index
      %28 = vector.load %arg6[%c0_13, %c0_14] : memref<8x128xf32, #tpu.memory_space<vmem>>, vector<8x128xf32>
      %cst_15 = arith.constant 0.000000e+00 : f32
      %29 = vector.broadcast %cst_15 : f32 to vector<8x128xf32>
      %30 = arith.maximumf %28, %29 : vector<8x128xf32>
      %c0_16 = arith.constant 0 : index
      %c0_17 = arith.constant 0 : index
      %31 = vector.load %arg6[%c0_16, %c0_17] : memref<8x128xf32, #tpu.memory_space<vmem>>, vector<8x128xf32>
      tpu.vector_store %arg6[%c0_16, %c0_17], %30 {strides = array<i32>} : memref<8x128xf32, #tpu.memory_space<vmem>>, vector<8x128xf32>,
    } else {
    }
    return
  }
  func.func @transform_0(%arg0: i32, %arg1: i32, %arg2: i32) -> (i32, i32) {
    %c0_i32 = arith.constant 0 : i32
    return %arg0, %arg2 : i32, i32
  }
  func.func @transform_1(%arg0: i32, %arg1: i32, %arg2: i32) -> (i32, i32) {
    %c0_i32 = arith.constant 0 : i32
    return %arg2, %arg1 : i32, i32
  }
  func.func @transform_2(%arg0: i32, %arg1: i32, %arg2: i32) -> (i32, i32) {
    %c0_i32 = arith.constant 0 : i32
    %c0_i32_0 = arith.constant 0 : i32
    return %c0_i32, %arg1 : i32, i32
  }
  func.func @transform_3(%arg0: i32, %arg1: i32, %arg2: i32) -> (i32, i32) {
    %c0_i32 = arith.constant 0 : i32
    return %arg0, %arg1 : i32, i32
  }
}

</mosaic_0001>

<llo_original>
// kernel: linear_dropout_relu.1
$region0: #{linear_dropout_relu.1}
  #allocation0 [shape = 'u32[]', space=smem, size = 0x4, offset = 0x4, fixed_abs, tag = 'smem constant byte address 0x4 - core index']
  #allocation1 [shape = 'u32[144,128]{1,0:T(1,128)}', space=vmem, size = 0x12000, scoped, tag = 'internal scratch']
  %s0 = inlined_call_operand.hbm [shape: f32[8,32], index: 0, kind: input, shape index: {}]
  %s1 = inlined_call_operand.hbm [shape: f32[32,128], index: 1, kind: input, shape index: {}]
  %s2 = inlined_call_operand.vmem [shape: f32[1,128], index: 2, kind: input, shape index: {}]
  %s3 = inlined_call_operand.hbm [shape: f32[8,128], index: 3, kind: output, shape index: {}]
  %s4 = sld [smem:[#allocation0]]
  $region38: #{linear_dropout_relu.1} parent=0
    _
  %s6 = ssub.s32 1, %s4
  %s7 = scalar_select 0, %s6, %s4
  $region1: #{linear_dropout_relu.1} parent=0
    #allocation2 [shape = 'u8[4096]{0}', space=vmem, size = 0x1000, scoped, tag = 'input window, operand 0, single buffered']
    #allocation3 [shape = 's32[1]{0}', space=sflag, size = 0x4, scoped, tag = 'scoped memory for linear_dropout_relu.1']
    #allocation4 [shape = 's32[1]{0}', space=sflag, size = 0x4, scoped, tag = 'scoped memory for linear_dropout_relu.1']
    #allocation5 [shape = 'u8[65536]{0}', space=vmem, size = 0x10000, scoped, tag = 'input window, operand 1, single buffered']
    #allocation6 [shape = 's32[1]{0}', space=sflag, size = 0x4, scoped, tag = 'scoped memory for linear_dropout_relu.1']
    #allocation7 [shape = 'u8[4096]{0}', space=vmem, size = 0x1000, scoped, tag = 'output window, operand 0, single buffered']
    %8 = vsyncpa [#allocation3], 0
    %9 = vsyncpa [#allocation6], 0
    %10 = vsyncpa [#allocation4], 0
    // Predicated region
    $region2: #{linear_dropout_relu.1} parent=1 // pred_check
      _
    $region3: #{linear_dropout_relu.1} parent=1 // pred_check_branch
      %12 = sbr.rel (0) target = $region5
    $region4: #{linear_dropout_relu.1} parent=1 // pred_region
      %s14 = ssub.s32 128, 128
      %15 = vsyncadd [#allocation3], %s14
      %s17 = sshll.u32 [#allocation2], 4
      %s18 = int_to_ptr.vmem [resolvable:$true] %s17
      %20 = dma.hbm_to_vmem [thread:$0]  %s0, 128, %s18, [#allocation3]
    $region5: #{linear_dropout_relu.1} parent=1 // pred_fallthru
      _
    // Predicated region
    $region6: #{linear_dropout_relu.1} parent=1 // pred_check
      _
    $region7: #{linear_dropout_relu.1} parent=1 // pred_check_branch
      %22 = sbr.rel (0) target = $region9
    $region8: #{linear_dropout_relu.1} parent=1 // pred_region
      %s24 = ssub.s32 2048, 512
      %25 = vsyncadd [#allocation6], %s24
      %s26 = sshll.u32 [#allocation5], 4
      %s27 = int_to_ptr.vmem [resolvable:$true] %s26
      %32 = dma.hbm_to_vmem [thread:$0]  %s1, 512, %s27, [#allocation6], 128, 128, 8
    $region9: #{linear_dropout_relu.1} parent=1 // pred_fallthru
      _
    // Predicated region
    $region10: #{linear_dropout_relu.1} parent=1 // pred_check
      _
    $region11: #{linear_dropout_relu.1} parent=1 // pred_check_branch
      %34 = sbr.rel (0) target = $region13
    $region12: #{linear_dropout_relu.1} parent=1 // pred_region
      _
    $region13: #{linear_dropout_relu.1} parent=1 // pred_fallthru
      _
    // Predicated region
    $region14: #{linear_dropout_relu.1} parent=1 // pred_check
      _
    $region15: #{linear_dropout_relu.1} parent=1 // pred_check_branch
      %36 = sbr.rel (0) target = $region17
    $region16: #{linear_dropout_relu.1} parent=1 // pred_region
      %37 = dma.done [#allocation3], 128
    $region17: #{linear_dropout_relu.1} parent=1 // pred_fallthru
      _
    // Predicated region
    $region18: #{linear_dropout_relu.1} parent=1 // pred_check
      _
    $region19: #{linear_dropout_relu.1} parent=1 // pred_check_branch
      %39 = sbr.rel (0) target = $region21
    $region20: #{linear_dropout_relu.1} parent=1 // pred_region
      %40 = dma.done [#allocation6], 2048
    $region21: #{linear_dropout_relu.1} parent=1 // pred_fallthru
      _
    %p42 = scmp.eq.s32.totalorder 0, 0
    // Predicated region
    $region22: #{linear_dropout_relu.1} parent=1 // pred_check
      %p43 = pneg %p42
    $region23: #{linear_dropout_relu.1} parent=1 // pred_check_branch
      %45 = sbr.rel (%p43) target = $region25
    $region24: #{linear_dropout_relu.1} parent=1 // pred_region
      %v46 = vld [vmem:[%s2] sm:$0x1]
      %v48 = vlaneseq
      %v49 = vshrl.u32 %v48, 7
      %v50 = vsub.s32 0, %v49
      %v51 = vrot.slane %v46, %v50
      %53 = vst [vmem:[#allocation7] sm:$0xff] %v51
    $region25: #{linear_dropout_relu.1} parent=1 // pred_fallthru
      _
    %v54 = vld [vmem:[#allocation2] sm:$0xff]
    %v55 = vld [vmem:[#allocation5] sm:$0xff]
    %v56 = vld [vmem:[#allocation5 + $0x8] sm:$0xff]
    %v57 = vld [vmem:[#allocation5 + $0x10] sm:$0xff]
    %v58 = vld [vmem:[#allocation5 + $0x18] sm:$0xff]
    %v59 = vld [vmem:[#allocation5 + $0x20] sm:$0xff]
    %v60 = vld [vmem:[#allocation5 + $0x28] sm:$0xff]
    %v61 = vld [vmem:[#allocation5 + $0x30] sm:$0xff]
    %v62 = vld [vmem:[#allocation5 + $0x38] sm:$0xff]
    %v63 = vld [vmem:[#allocation5 + $0x40] sm:$0xff]
    %v64 = vld [vmem:[#allocation5 + $0x48] sm:$0xff]
    %v65 = vld [vmem:[#allocation5 + $0x50] sm:$0xff]
    %v66 = vld [vmem:[#allocation5 + $0x58] sm:$0xff]
    %v67 = vld [vmem:[#allocation5 + $0x60] sm:$0xff]
    %v68 = vld [vmem:[#allocation5 + $0x68] sm:$0xff]
    %v69 = vld [vmem:[#allocation5 + $0x70] sm:$0xff]
    %v70 = vld [vmem:[#allocation5 + $0x78] sm:$0xff]
    %s71 = scalar_select %p42, 32, 128
    %v72 = vlaneseq
    %v73 = vand.u32 %v72, 127
    %v74 = vlaneseq
    %v75 = vshrl.u32 %v74, 7
    %v76 = vadd.s32 %v75, 8
    %v77 = vadd.s32 %v75, 16
    %v78 = vadd.s32 %v75, 24
    %v79 = vadd.s32 %v75, 32
    %v80 = vadd.s32 %v75, 40
    %v81 = vadd.s32 %v75, 48
    %v82 = vadd.s32 %v75, 56
    %v83 = vadd.s32 %v75, 64
    %v84 = vadd.s32 %v75, 72
    %v85 = vadd.s32 %v75, 80
    %v86 = vadd.s32 %v75, 88
    %v87 = vadd.s32 %v75, 96
    %v88 = vadd.s32 %v75, 104
    %v89 = vadd.s32 %v75, 112
    %v90 = vadd.s32 %v75, 120
    %v91 = vstv %s71
    %vm92 = vcmp.lt.s32.totalorder %v73, %v91
    %v93 = vsel %vm92, %v54, 0.0
    %vm94 = vcmp.lt.s32.totalorder %v75, %v91
    %vm95 = vcmp.lt.s32.totalorder %v76, %v91
    %vm96 = vcmp.lt.s32.totalorder %v77, %v91
    %vm97 = vcmp.lt.s32.totalorder %v78, %v91
    %vm98 = vcmp.lt.s32.totalorder %v79, %v91
    %vm99 = vcmp.lt.s32.totalorder %v80, %v91
    %vm100 = vcmp.lt.s32.totalorder %v81, %v91
    %vm101 = vcmp.lt.s32.totalorder %v82, %v91
    %vm102 = vcmp.lt.s32.totalorder %v83, %v91
    %vm103 = vcmp.lt.s32.totalorder %v84, %v91
    %vm104 = vcmp.lt.s32.totalorder %v85, %v91
    %vm105 = vcmp.lt.s32.totalorder %v86, %v91
    %vm106 = vcmp.lt.s32.totalorder %v87, %v91
    %vm107 = vcmp.lt.s32.totalorder %v88, %v91
    %vm108 = vcmp.lt.s32.totalorder %v89, %v91
    %vm109 = vcmp.lt.s32.totalorder %v90, %v91
    %v110 = vsel %vm94, %v55, 0.0
    %v111 = vsel %vm95, %v56, 0.0
    %v112 = vsel %vm96, %v57, 0.0
    %v113 = vsel %vm97, %v58, 0.0
    %v114 = vsel %vm98, %v59, 0.0
    %v115 = vsel %vm99, %v60, 0.0
    %v116 = vsel %vm100, %v61, 0.0
    %v117 = vsel %vm101, %v62, 0.0
    %v118 = vsel %vm102, %v63, 0.0
    %v119 = vsel %vm103, %v64, 0.0
    %v120 = vsel %vm104, %v65, 0.0
    %v121 = vsel %vm105, %v66, 0.0
    %v122 = vsel %vm106, %v67, 0.0
    %v123 = vsel %vm107, %v68, 0.0
    %v124 = vsel %vm108, %v69, 0.0
    %v125 = vsel %vm109, %v70, 0.0
    %v126 = vld [vmem:[#allocation7] sm:$0xff]
    %v127 = vpack.c.bf16 %v93, %v93
    %v128 = vpack.c.bf16 %v111, %v110
    %v129 = vpack.c.bf16 %v113, %v112
    %v130 = vpack.c.bf16 %v115, %v114
    %v131 = vpack.c.bf16 %v117, %v116
    %v132 = vpack.c.bf16 %v119, %v118
    %v133 = vpack.c.bf16 %v121, %v120
    %v134 = vpack.c.bf16 %v123, %v122
    %v135 = vpack.c.bf16 %v125, %v124
    %136 = vmatprep.subr.bf16.mxu0 0
    %137 = vmatpush1.bf16.msra.mxu0 %v135
    %138 = vmatprep.subr.bf16.mxu0 0
    %139 = vmatpush1.bf16.msra.mxu0 %v134
    %140 = vmatprep.subr.bf16.mxu0 0
    %141 = vmatpush1.bf16.msra.mxu0 %v133
    %142 = vmatprep.subr.bf16.mxu0 0
    %143 = vmatpush1.bf16.msra.mxu0 %v132
    %144 = vmatprep.subr.bf16.mxu0 0
    %145 = vmatpush1.bf16.msra.mxu0 %v131
    %146 = vmatprep.subr.bf16.mxu0 0
    %147 = vmatpush1.bf16.msra.mxu0 %v130
    %148 = vmatprep.subr.bf16.mxu0 0
    %149 = vmatpush1.bf16.msra.mxu0 %v129
    %150 = vmatprep.subr.bf16.mxu0 0
    %151 = vmatpush1.bf16.msra.mxu0 %v128
    %152 = vmatprep.subr.bf16.mxu0 0
    %153 = vmatpush2.bf16.msra.mxu0 0
    %154 = vmatprep.subr.bf16.mxu0 0
    %155 = vmatpush2.bf16.msra.mxu0 0
    %156 = vmatprep.subr.bf16.mxu0 0
    %157 = vmatpush2.bf16.msra.mxu0 0
    %158 = vmatprep.subr.bf16.mxu0 0
    %159 = vmatpush2.bf16.msra.mxu0 0
    %160 = vmatprep.subr.bf16.mxu0 0
    %161 = vmatpush2.bf16.msra.mxu0 0
    %162 = vmatprep.subr.bf16.mxu0 0
    %163 = vmatpush2.bf16.msra.mxu0 0
    %164 = vmatprep.subr.bf16.mxu0 0
    %165 = vmatpush2.bf16.msra.mxu0 0
    %166 = vmatprep.subr.bf16.mxu0 0
    %167 = vmatpush2.bf16.msra.mxu0 0
    %168 = vmatprep.mubr.bf16.mxu0 0
    %169 = vmatmul.mubr.bf16.gmra.mxu0 %v127
    %v170 = vpop.f32.mrf.mxu0
    %v171 = vadd.f32 0.0, %v170
    %v172 = vpop.f32.mrf.mxu0
    %v173 = vpop.f32.mrf.mxu0
    %v174 = vpop.f32.mrf.mxu0
    %175 = vdwg.mxu0
    %v176 = vadd.f32 %v126, %v171
    %177 = vst [vmem:[#allocation7] sm:$0xff] %v176
    // Predicated region
    $region26: #{linear_dropout_relu.1} parent=1 // pred_check
      %p178 = pneg %p42
    $region27: #{linear_dropout_relu.1} parent=1 // pred_check_branch
      %180 = sbr.rel (%p178) target = $region29
    $region28: #{linear_dropout_relu.1} parent=1 // pred_region
      %v181 = vld [vmem:[#allocation7] sm:$0xff]
      %v182 = vmax.f32 %v181, 0.0
      %183 = vst [vmem:[#allocation7] sm:$0xff] %v182
    $region29: #{linear_dropout_relu.1} parent=1 // pred_fallthru
      _
    // Predicated region
    $region30: #{linear_dropout_relu.1} parent=1 // pred_check
      _
    $region31: #{linear_dropout_relu.1} parent=1 // pred_check_branch
      %185 = sbr.rel (0) target = $region33
    $region32: #{linear_dropout_relu.1} parent=1 // pred_region
      %s187 = ssub.s32 128, 128
      %188 = vsyncadd [#allocation4], %s187
      %s190 = sshll.u32 [#allocation7], 4
      %s191 = int_to_ptr.vmem [resolvable:$true] %s190
      %193 = dma.vmem_to_hbm [thread:$0]  %s191, 128, %s3, [#allocation4]
    $region33: #{linear_dropout_relu.1} parent=1 // pred_fallthru
      _
    // Predicated region
    $region34: #{linear_dropout_relu.1} parent=1 // pred_check
      _
    $region35: #{linear_dropout_relu.1} parent=1 // pred_check_branch
      %195 = sbr.rel (0) target = $region37
    $region36: #{linear_dropout_relu.1} parent=1 // pred_region
      %196 = dma.done [#allocation4], 128
    $region37: #{linear_dropout_relu.1} parent=1 // pred_fallthru
      _
    %197 = vsyncpa [#allocation3], 1
    %198 = vsyncpa [#allocation6], 1
    %199 = vsyncpa [#allocation4], 1

</llo_original>
